<compile_context>
chip_gen: v7x
topology: tpu7x:2x2x1
jax: 0.10.0
libtpu: 0.0.40
codegen_flags: <defaults>
</compile_context>

<pallas_src>
import functools

import jax
import jax.numpy as jnp
from jax.experimental import pallas as pl
from jax.experimental.pallas import tpu as pltpu

QUANTILES = (0.1, 0.5, 0.9)

_LANES = 128           # lane width of a vreg
_MAX_TILE_ROWS = 4096  # 4096 x 128 f32 = 2 MiB per input block


def _num_row_shards() -> int:
    """2-way shard only on chips with two TensorCores per device (v7x, v4-class)."""
    try:
        kind = jax.devices()[0].device_kind.lower()
    except Exception:
        return 1
    if any(tok in kind for tok in ("v7", "7x", "tpu7", "v4")):
        return 2
    return 1


def _quantile_loss_kernel(pred_ref, target_ref, out_ref, *,
                          w_pos, w_neg, rows_valid, needs_mask):
    c = pl.program_id(0)
    i = pl.program_id(1)

    # Zero the resident per-shard accumulator block at the first reduction step.
    @pl.when(i == 0)
    def _init():
        out_ref[...] = jnp.zeros_like(out_ref)

    tile_r = pred_ref.shape[0]

    # Cast in-kernel: inputs stream from HBM in their native dtype.
    p = pred_ref[...].astype(jnp.float32)
    t = target_ref[...].astype(jnp.float32)
    e = t - p

    if needs_mask:
        # Rows past the true end of the data (partial last block / clamped
        # over-allocated grid steps) contain garbage -> zero them BEFORE the
        # max/sum.  Mask is built from the LOGICAL block index.
        steps = pl.num_programs(1)
        row0 = (c * steps + i) * tile_r
        row_ids = jax.lax.broadcasted_iota(jnp.int32, (tile_r, _LANES), 0) + row0
        e = jnp.where(row_ids < rows_valid, e, 0.0)

    # sum_q max(q*e, (q-1)*e) = (sum_q q)*max(e,0) + (sum_q (1-q))*max(-e,0):
    # a single fused reduction per element instead of one mean per quantile.
    contrib = w_pos * jnp.maximum(e, 0.0) + w_neg * jnp.maximum(-e, 0.0)

    if tile_r % 8 == 0:
        # Fold rows onto a full (8, 128) vreg: free leading-dim reshape + vreg
        # adds, and the accumulator store is an unmasked full vreg.
        partial = contrib.reshape(-1, 8, _LANES).sum(axis=0)       # (8, 128)
    else:
        # Tiny inputs only (rows < 8): single cross-sublane reduce.
        partial = contrib.sum(axis=0, keepdims=True)                # (1, 128)

    out_ref[...] += partial[None]


def quantile_loss(pred: jax.Array, target: jax.Array,
                  quantiles=QUANTILES) -> jax.Array:
    """Pallas TPU implementation of QuantileLoss.forward(pred, target)."""
    assert pred.shape == target.shape
    n = int(pred.size)
    assert n > 0
    nq = len(quantiles)

    w_pos = float(sum(float(q) for q in quantiles))   # sum_q q
    w_neg = float(nq) - w_pos                         # sum_q (1 - q)
    inv_scale = 1.0 / (n * nq)                        # true (unpadded) N

    # Lane-dense (rows, 128) HBM view.  Free bitcast reshape when n % 128 == 0;
    # otherwise pad only the ragged tail to the next multiple of 128 (native
    # dtype, zeros contribute 0 to the pinball loss).
    rem = n % _LANES
    pad = 0 if rem == 0 else _LANES - rem
    rows = (n + pad) // _LANES

    def _as_rows(x):
        x = x.reshape(-1)
        if pad:
            x = jnp.pad(x, (0, pad))
        return x.reshape(rows, _LANES)

    p2d = _as_rows(pred)
    t2d = _as_rows(target)

    # Tiling: full-array block for small inputs, 4096-row blocks otherwise.
    tile_r = rows if rows <= _MAX_TILE_ROWS else _MAX_TILE_ROWS
    nblocks = pl.cdiv(rows, tile_r)

    shards = _num_row_shards()
    if nblocks < 2 * shards:
        shards = 1
    steps = pl.cdiv(nblocks, shards)

    acc_rows = 8 if tile_r % 8 == 0 else 1
    # Mask is only needed if some block extends past the last valid row or the
    # (shards * steps) grid over-allocates blocks (handled by clamping below).
    needs_mask = (rows % tile_r != 0) or (shards * steps != nblocks)
    last_block = nblocks - 1

    def in_map(c, i):
        # Clamp so over-allocated (shard, step) pairs re-read the last valid
        # block; their contribution is zeroed by the in-kernel row mask.
        return (jnp.minimum(c * steps + i, last_block), 0)

    kernel = functools.partial(
        _quantile_loss_kernel,
        w_pos=w_pos, w_neg=w_neg, rows_valid=rows, needs_mask=needs_mask)

    partials = pl.pallas_call(
        kernel,
        out_shape=jax.ShapeDtypeStruct((shards, acc_rows, _LANES), jnp.float32),
        grid_spec=pltpu.PrefetchScalarGridSpec(
            num_scalar_prefetch=0,
            grid=(shards, steps),
            in_specs=[
                pl.BlockSpec((tile_r, _LANES), in_map),
                pl.BlockSpec((tile_r, _LANES), in_map),
            ],
            # Per-shard resident accumulator block (full (8,128) vreg when
            # possible -> unmasked stores).
            out_specs=pl.BlockSpec((1, acc_rows, _LANES), lambda c, i: (c, 0, 0)),
        ),
        compiler_params=pltpu.CompilerParams(
            dimension_semantics=("parallel", "arbitrary"),
            vmem_limit_bytes=32 * 1024 * 1024,
        ),
    )(p2d, t2d)

    # Tiny epilogue: combine per-shard / per-lane partials and scale once.
    return jnp.sum(partials) * jnp.float32(inv_scale)


def quantile_loss_ref(pred, target, quantiles=QUANTILES):
    """Pure-JAX reference mirroring the PyTorch module exactly."""
    e = target.astype(jnp.float32) - pred.astype(jnp.float32)
    losses = [jnp.mean(jnp.maximum(q * e, (q - 1.0) * e)) for q in quantiles]
    return sum(losses) / len(losses)


if __name__ == "__main__":
    key = jax.random.PRNGKey(0)
    k1, k2, k3, k4, k5, k6 = jax.random.split(key, 6)

    # Small shape matching the PyTorch module: pred/target [batch_size, 1].
    batch = 16
    pred = jax.random.normal(k1, (batch, 1), dtype=jnp.float32)
    target = jax.random.normal(k2, (batch, 1), dtype=jnp.float32)
    loss = quantile_loss(pred, target)
    jax.block_until_ready(loss)
    ref = quantile_loss_ref(pred, target)
    assert jnp.allclose(loss, ref, rtol=1e-5, atol=1e-6), (loss, ref)

    # Copy-free fast path: n % 128 == 0, multi-step accumulation, partial
    # (masked) last row-block.
    n2 = 128 * 15_624  # ~2.0e6 elements -> 15624 rows -> 4 blocks of 4096
    pred2 = jax.random.normal(k3, (n2, 1), dtype=jnp.float32)
    target2 = jax.random.normal(k4, (n2, 1), dtype=jnp.float32)
    loss2 = quantile_loss(pred2, target2)
    jax.block_until_ready(loss2)
    ref2 = quantile_loss_ref(pred2, target2)
    assert jnp.allclose(loss2, ref2, rtol=1e-4, atol=1e-5), (loss2, ref2)

    # Ragged tail (n % 128 != 0) streamed in native bf16 (cast happens in-kernel).
    n3 = 300_001
    pred3 = jax.random.normal(k5, (n3, 1), dtype=jnp.bfloat16)
    target3 = jax.random.normal(k6, (n3, 1), dtype=jnp.bfloat16)
    loss3 = quantile_loss(pred3, target3)
    jax.block_until_ready(loss3)
    ref3 = quantile_loss_ref(pred3, target3)
    assert jnp.allclose(loss3, ref3, rtol=2e-3, atol=1e-4), (loss3, ref3)

    print("KERNEL_OK")
</pallas_src>

<mosaic_0001>
module attributes {stable_mosaic.version = 11 : i64} {
  func.func @_quantile_loss_kernel(%arg0: i32, %arg1: i32, %arg2: memref<1x128xf32, #tpu.memory_space<vmem>>, %arg3: memref<1x128xf32, #tpu.memory_space<vmem>>, %arg4: memref<1x1x128xf32, #tpu.memory_space<vmem>>) attributes {dimension_semantics = [#tpu.dimension_semantics<parallel>, #tpu.dimension_semantics<arbitrary>], iteration_bounds = array<i64: 1, 1>, scalar_prefetch = 0 : i64, scratch_operands = 0 : i64, tpu.core_type = #tpu.core_type<tc>, window_params = [{transform_indices = @transform_0, window_bounds = array<i64: 1, 128>}, {transform_indices = @transform_1, window_bounds = array<i64: 1, 128>}, {transform_indices = @transform_2, window_bounds = array<i64: 1, 1, 128>}]} {
    %c0_i32 = arith.constant 0 : i32
    %0 = arith.cmpi eq, %arg1, %c0_i32 : i32
    %1 = arith.extui %0 : i1 to i32
    %c0_i32_0 = arith.constant 0 : i32
    %2 = arith.cmpi ne, %1, %c0_i32_0 : i32
    scf.if %2 {
      %cst_15 = arith.constant 0.000000e+00 : f32
      %23 = vector.broadcast %cst_15 : f32 to vector<1x1x128xf32>
      %c0_16 = arith.constant 0 : index
      %c0_17 = arith.constant 0 : index
      %c0_18 = arith.constant 0 : index
      %24 = vector.load %arg4[%c0_16, %c0_17, %c0_18] : memref<1x1x128xf32, #tpu.memory_space<vmem>>, vector<1x1x128xf32>
      tpu.vector_store %arg4[%c0_16, %c0_17, %c0_18], %23 {strides = array<i32>} : memref<1x1x128xf32, #tpu.memory_space<vmem>>, vector<1x1x128xf32>,
    } else {
    }
    %c0 = arith.constant 0 : index
    %c0_1 = arith.constant 0 : index
    %3 = vector.load %arg2[%c0, %c0_1] : memref<1x128xf32, #tpu.memory_space<vmem>>, vector<1x128xf32>
    %c0_2 = arith.constant 0 : index
    %c0_3 = arith.constant 0 : index
    %4 = vector.load %arg3[%c0_2, %c0_3] : memref<1x128xf32, #tpu.memory_space<vmem>>, vector<1x128xf32>
    %5 = arith.subf %4, %3 : vector<1x128xf32>
    %cst = arith.constant 0.000000e+00 : f32
    %6 = vector.broadcast %cst : f32 to vector<1x128xf32>
    %7 = arith.maximumf %5, %6 : vector<1x128xf32>
    %cst_4 = arith.constant 1.500000e+00 : f32
    %8 = vector.broadcast %cst_4 : f32 to vector<1x128xf32>
    %9 = arith.mulf %8, %7 : vector<1x128xf32>
    %cst_5 = arith.constant 0.000000e+00 : f32
    %10 = vector.broadcast %cst_5 : f32 to vector<1x128xf32>
    %11 = arith.subf %10, %5 : vector<1x128xf32>
    %cst_6 = arith.constant 0.000000e+00 : f32
    %12 = vector.broadcast %cst_6 : f32 to vector<1x128xf32>
    %13 = arith.maximumf %11, %12 : vector<1x128xf32>
    %cst_7 = arith.constant 1.500000e+00 : f32
    %14 = vector.broadcast %cst_7 : f32 to vector<1x128xf32>
    %15 = arith.mulf %14, %13 : vector<1x128xf32>
    %16 = arith.addf %9, %15 : vector<1x128xf32>
    %cst_8 = arith.constant dense<0.000000e+00> : vector<128xf32>
    %17 = vector.multi_reduction <add>, %16, %cst_8 [0] : vector<1x128xf32> to vector<128xf32>
    %18 = vector.shape_cast %17 : vector<128xf32> to vector<1x128xf32>
    %c0_9 = arith.constant 0 : index
    %c0_10 = arith.constant 0 : index
    %c0_11 = arith.constant 0 : index
    %19 = vector.load %arg4[%c0_9, %c0_10, %c0_11] : memref<1x1x128xf32, #tpu.memory_space<vmem>>, vector<1x1x128xf32>
    %20 = vector.shape_cast %18 : vector<1x128xf32> to vector<1x1x128xf32>
    %21 = arith.addf %19, %20 : vector<1x1x128xf32>
    %c0_12 = arith.constant 0 : index
    %c0_13 = arith.constant 0 : index
    %c0_14 = arith.constant 0 : index
    %22 = vector.load %arg4[%c0_12, %c0_13, %c0_14] : memref<1x1x128xf32, #tpu.memory_space<vmem>>, vector<1x1x128xf32>
    tpu.vector_store %arg4[%c0_12, %c0_13, %c0_14], %21 {strides = array<i32>} : memref<1x1x128xf32, #tpu.memory_space<vmem>>, vector<1x1x128xf32>,
    return
  }
  func.func @transform_0(%arg0: i32, %arg1: i32) -> (i32, i32) {
    %c1_i32 = arith.constant 1 : i32
    %0 = arith.muli %arg0, %c1_i32 : i32
    %1 = arith.addi %0, %arg1 : i32
    %c0_i32 = arith.constant 0 : i32
    %2 = arith.minsi %1, %c0_i32 : i32
    %c0_i32_0 = arith.constant 0 : i32
    %c0_i32_1 = arith.constant 0 : i32
    return %2, %c0_i32_0 : i32, i32
  }
  func.func @transform_1(%arg0: i32, %arg1: i32) -> (i32, i32) {
    %c1_i32 = arith.constant 1 : i32
    %0 = arith.muli %arg0, %c1_i32 : i32
    %1 = arith.addi %0, %arg1 : i32
    %c0_i32 = arith.constant 0 : i32
    %2 = arith.minsi %1, %c0_i32 : i32
    %c0_i32_0 = arith.constant 0 : i32
    %c0_i32_1 = arith.constant 0 : i32
    return %2, %c0_i32_0 : i32, i32
  }
  func.func @transform_2(%arg0: i32, %arg1: i32) -> (i32, i32, i32) {
    %c0_i32 = arith.constant 0 : i32
    %c0_i32_0 = arith.constant 0 : i32
    %c0_i32_1 = arith.constant 0 : i32
    return %arg0, %c0_i32, %c0_i32_0 : i32, i32, i32
  }
}

</mosaic_0001>

<llo_original>
// kernel: tpu_custom_call.1
$region0: #{tpu_custom_call.1}
  #allocation0 [shape = 'u32[]', space=smem, size = 0x4, offset = 0x4, fixed_abs, tag = 'smem constant byte address 0x4 - core index']
  #allocation1 [shape = 'u32[144,128]{1,0:T(1,128)}', space=vmem, size = 0x12000, scoped, tag = 'internal scratch']
  %s0 = inlined_call_operand.hbm [shape: f32[1,128], index: 0, kind: input, shape index: {}]
  %s1 = inlined_call_operand.vmem [shape: f32[1,128], index: 1, kind: input, shape index: {}]
  %s2 = inlined_call_operand.hbm [shape: f32[1,1,128], index: 2, kind: output, shape index: {}]
  %s3 = sld [smem:[#allocation0]]
  $region26: #{tpu_custom_call.1} parent=0
    _
  %s5 = ssub.s32 1, %s3
  %s6 = scalar_select 0, %s5, %s3
  $region1: #{tpu_custom_call.1} parent=0
    #allocation2 [shape = 'u8[512]{0}', space=vmem, size = 0x400, scoped, tag = 'input window, operand 0, single buffered']
    #allocation3 [shape = 's32[1]{0}', space=sflag, size = 0x4, scoped, tag = 'scoped memory for tpu_custom_call.1']
    #allocation4 [shape = 's32[1]{0}', space=sflag, size = 0x4, scoped, tag = 'scoped memory for tpu_custom_call.1']
    #allocation5 [shape = 'u8[512]{0}', space=vmem, size = 0x400, scoped, tag = 'output window, operand 0, single buffered']
    %7 = vsyncpa [#allocation3], 0
    %8 = vsyncpa [#allocation4], 0
    // Predicated region
    $region2: #{tpu_custom_call.1} parent=1 // pred_check
      _
    $region3: #{tpu_custom_call.1} parent=1 // pred_check_branch
      %10 = sbr.rel (0) target = $region5
    $region4: #{tpu_custom_call.1} parent=1 // pred_region
      %s11 = sadd.s32 0, 0
      %p12 = scmp.lt.s32.totalorder %s11, 0
      %s13 = scalar_select %p12, %s11, 0
      %s15 = ssub.s32 16, 16
      %16 = vsyncadd [#allocation3], %s15
      %s17 = smul.addr %s13, 16
      %s18 = scalar_lea.hbm %s0, %s17
      %s20 = sshll.u32 [#allocation2], 4
      %s21 = int_to_ptr.vmem [resolvable:$true] %s20
      %23 = dma.hbm_to_vmem [thread:$0]  %s18, 16, %s21, [#allocation3]
    $region5: #{tpu_custom_call.1} parent=1 // pred_fallthru
      _
    // Predicated region
    $region6: #{tpu_custom_call.1} parent=1 // pred_check
      _
    $region7: #{tpu_custom_call.1} parent=1 // pred_check_branch
      %25 = sbr.rel (0) target = $region9
    $region8: #{tpu_custom_call.1} parent=1 // pred_region
      %s26 = sadd.s32 0, 0
      %p27 = scmp.lt.s32.totalorder %s26, 0
      %s28 = scalar_select %p27, %s26, 0
      %p29 = scmp.lt.s32.totalorder %s28, 0
      %s30 = scalar_select %p29, %s28, 0
      %s31 = scalar_lea.vmem %s1, %s30
      %s32 = sadd.s32 0, 0
      %p33 = scmp.lt.s32.totalorder %s32, 0
      %s34 = scalar_select %p33, %s32, 0
    $region9: #{tpu_custom_call.1} parent=1 // pred_fallthru
      _
    // Predicated region
    $region10: #{tpu_custom_call.1} parent=1 // pred_check
      _
    $region11: #{tpu_custom_call.1} parent=1 // pred_check_branch
      %36 = sbr.rel (0) target = $region13
    $region12: #{tpu_custom_call.1} parent=1 // pred_region
      %37 = dma.done [#allocation3], 16
    $region13: #{tpu_custom_call.1} parent=1 // pred_fallthru
      _
    %s38 = sadd.s32 0, 0
    %p39 = scmp.lt.s32.totalorder %s38, 0
    %s40 = scalar_select %p39, %s38, 0
    %p41 = scmp.lt.s32.totalorder %s40, 0
    %s42 = scalar_select %p41, %s40, 0
    %s43 = scalar_lea.vmem %s1, %s42
    %s44 = sadd.s32 0, 0
    %p45 = scmp.lt.s32.totalorder %s44, 0
    %s46 = scalar_select %p45, %s44, 0
    %s47 = sadd.s32 0, 0
    %p48 = scmp.lt.s32.totalorder %s47, 0
    %s49 = scalar_select %p48, %s47, 0
    %p50 = scmp.lt.s32.totalorder %s49, 0
    %s51 = scalar_select %p50, %s49, 0
    %s52 = scalar_lea.vmem %s1, %s51
    %s53 = sadd.s32 0, 0
    %p54 = scmp.lt.s32.totalorder %s53, 0
    %s55 = scalar_select %p54, %s53, 0
    %p56 = scmp.eq.s32.totalorder 0, 0
    // Predicated region
    $region14: #{tpu_custom_call.1} parent=1 // pred_check
      %p57 = pneg %p56
    $region15: #{tpu_custom_call.1} parent=1 // pred_check_branch
      %59 = sbr.rel (%p57) target = $region17
    $region16: #{tpu_custom_call.1} parent=1 // pred_region
      %60 = vst [vmem:[#allocation5] sm:$0x1] 0.0
    $region17: #{tpu_custom_call.1} parent=1 // pred_fallthru
      _
    %v61 = vld [vmem:[#allocation2] sm:$0x1]
    %v62 = vld [vmem:[%s52] sm:$0x1]
    %v63 = vsub.f32 %v62, %v61
    %v64 = vmax.f32 %v63, 0.0
    %v65 = vmul.f32 %v64, 1.5
    %v66 = vsub.f32 0.0, %v63
    %v67 = vmax.f32 %v66, 0.0
    %v68 = vmul.f32 %v67, 1.5
    %v69 = vadd.f32 %v65, %v68
    %v70 = vadd.f32 %v69, 0.0
    %v71 = vld [vmem:[#allocation5] sm:$0x1]
    %v72 = vadd.f32 %v71, %v70
    %73 = vst [vmem:[#allocation5] sm:$0x1] %v72
    // Predicated region
    $region18: #{tpu_custom_call.1} parent=1 // pred_check
      _
    $region19: #{tpu_custom_call.1} parent=1 // pred_check_branch
      %75 = sbr.rel (0) target = $region21
    $region20: #{tpu_custom_call.1} parent=1 // pred_region
      %s77 = ssub.s32 16, 16
      %78 = vsyncadd [#allocation4], %s77
      %s80 = sshll.u32 [#allocation5], 4
      %s81 = int_to_ptr.vmem [resolvable:$true] %s80
      %83 = dma.vmem_to_hbm [thread:$0]  %s81, 16, %s2, [#allocation4]
    $region21: #{tpu_custom_call.1} parent=1 // pred_fallthru
      _
    // Predicated region
    $region22: #{tpu_custom_call.1} parent=1 // pred_check
      _
    $region23: #{tpu_custom_call.1} parent=1 // pred_check_branch
      %85 = sbr.rel (0) target = $region25
    $region24: #{tpu_custom_call.1} parent=1 // pred_region
      %86 = dma.done [#allocation4], 16
    $region25: #{tpu_custom_call.1} parent=1 // pred_fallthru
      _
    %87 = vsyncpa [#allocation3], 1
    %88 = vsyncpa [#allocation4], 1

</llo_original>
